<compile_context>
chip_gen: v7x
topology: tpu7x:2x2x1
jax: 0.10.0
libtpu: 0.0.40
codegen_flags: <defaults>
</compile_context>

<pallas_src>
import jax
import jax.numpy as jnp
from jax.experimental import pallas as pl
from jax.experimental.pallas import tpu as pltpu


# ----------------------------- Pallas kernels -----------------------------

def _proj_resident_kernel(x_ref, w_ref, b_ref, o_ref):
    """One (tm, K) @ (K, E) matmul per grid step; full weight resident in VMEM."""
    acc = jnp.dot(x_ref[...], w_ref[...], preferred_element_type=jnp.float32)
    o_ref[...] = (acc + b_ref[...]).astype(o_ref.dtype)


def _proj_ktiled_kernel(x_ref, w_ref, b_ref, o_ref, acc_ref):
    """Fallback: (M, K) grid, K innermost/sequential, bias folded into k==0 init."""
    k = pl.program_id(1)

    @pl.when(k == 0)
    def _():
        acc_ref[...] = jnp.broadcast_to(b_ref[...], acc_ref.shape)

    acc_ref[...] += jnp.dot(x_ref[...], w_ref[...],
                            preferred_element_type=jnp.float32)

    @pl.when(k == pl.num_programs(1) - 1)
    def _():
        o_ref[...] = acc_ref[...].astype(o_ref.dtype)


# --------------------------- VMEM / tiling plan ----------------------------

_FALLBACK_VMEM_CAP = 64 * 1024 * 1024      # assume v7x (64 MiB / TC) if query fails


def _vmem_budget():
    """(vmem_limit_bytes, planning budget) derived from the chip's VMEM size."""
    cap = _FALLBACK_VMEM_CAP
    try:
        cap = int(pltpu.get_tpu_info().vmem_capacity_bytes)
    except Exception:
        pass
    # ~13/16 of physical VMEM, but never closer than 16 MiB to the cap
    # (headroom for Mosaic internal scratch / semaphores).
    limit = max(32 << 20, min(cap * 13 // 16, cap - (16 << 20)))
    plan = max(24 << 20, limit - (8 << 20))
    return limit, plan


def _round_up(x, m):
    return (x + m - 1) // m * m


def _cdiv(a, b):
    return (a + b - 1) // b


_TM_CANDIDATES = (1024, 512, 256, 128, 64, 32, 16, 8)


def _rank_tm(n):
    def rank(tm):
        steps = _cdiv(n, tm)
        # >= 2 grid steps keeps both v7x TensorCores busy, an even step count
        # splits them evenly; after that prefer the largest tile (fewer
        # per-step overheads -- ~0.35 us/step).
        return (steps >= 2, steps % 2 == 0, tm)
    return rank


def _pick_tm_resident(n, k, e, isz, osz, plan):
    cap = max(8, _round_up(n, 8))

    def need(tm):
        # double-buffered LHS/out blocks + resident (K, E) weight
        # (conservatively counted double-buffered) + bias row.
        return 2 * tm * k * isz + 2 * tm * e * osz + 2 * k * e * isz + 2 * e * 4

    feas = [t for t in _TM_CANDIDATES if t <= cap and need(t) <= plan]
    if not feas:
        return None
    return max(feas, key=_rank_tm(n))


def _pick_tk(k):
    for tk in (512, 256, 128):
        if k % tk == 0:
            return tk
    return None


def _pick_ktiled(n, k, e, isz, osz, plan):
    tk = _pick_tk(k)
    if tk is None:
        return None
    cap = max(8, _round_up(n, 8))

    def need(tm):
        return 2 * tm * tk * isz + 2 * tk * e * isz + 2 * tm * e * osz + tm * e * 4

    feas = [t for t in _TM_CANDIDATES if t <= cap and need(t) <= plan]
    if not feas:
        return None
    return max(feas, key=_rank_tm(n)), tk


# ------------------------------ matmul wrapper -----------------------------

def _patch_proj(patches, w_kE, bias_1E, out_dtype, vmem_limit, vmem_plan,
                force_ktiled=False):
    """(N, K) @ (K, E) + bias -> (N, E), row-tiled Pallas matmul."""
    N, K = patches.shape
    Kw, E = w_kE.shape
    assert K == Kw
    isz = jnp.dtype(patches.dtype).itemsize
    osz = jnp.dtype(out_dtype).itemsize

    resident_tm = _pick_tm_resident(N, K, E, isz, osz, vmem_plan)
    ktiled_plan = _pick_ktiled(N, K, E, isz, osz, vmem_plan)

    if force_ktiled and ktiled_plan is not None:
        use_resident = False
    elif resident_tm is not None:
        use_resident = True
    elif ktiled_plan is not None:
        use_resident = False
    else:
        # Nothing fits the planning budget (pathological K*E with K not
        # 128-divisible): smallest resident tile under the raised limit.
        use_resident = True
        resident_tm = 8

    tm = resident_tm if use_resident else ktiled_plan[0]
    Np = _round_up(N, tm)
    if Np != N:
        patches = jnp.pad(patches, ((0, Np - N), (0, 0)))

    if use_resident:
        cost = pl.CostEstimate(
            flops=2 * Np * K * E,
            bytes_accessed=Np * K * isz + K * E * isz + 4 * E + Np * E * osz,
            transcendentals=0)
        out = pl.pallas_call(
            _proj_resident_kernel,
            out_shape=jax.ShapeDtypeStruct((Np, E), out_dtype),
            grid_spec=pltpu.PrefetchScalarGridSpec(
                num_scalar_prefetch=0,
                grid=(Np // tm,),
                in_specs=[
                    pl.BlockSpec((tm, K), lambda i: (i, 0)),
                    # Resident weight (constant index map -> fetched once).
                    # TODO(synk): pin it to a single buffer (pl.Buffered(1))
                    # once verified everywhere; budgeted at 2x above.
                    pl.BlockSpec((K, E), lambda i: (0, 0)),
                    pl.BlockSpec((1, E), lambda i: (0, 0)),
                ],
                out_specs=pl.BlockSpec((tm, E), lambda i: (i, 0)),
            ),
            compiler_params=pltpu.CompilerParams(
                dimension_semantics=("parallel",),
                vmem_limit_bytes=vmem_limit,
                # Let XLA fuse the wrapper-side patch extraction into the
                # kernel's input when it can (avoids the (N, K) HBM round trip).
                allow_input_fusion=[True, False, False],
            ),
            cost_estimate=cost,
        )(patches, w_kE, bias_1E)
    else:
        tk = ktiled_plan[1]
        cost = pl.CostEstimate(
            flops=2 * Np * K * E,
            bytes_accessed=(Np * K * isz + (Np // tm) * K * E * isz
                            + 4 * E + Np * E * osz),
            transcendentals=0)
        out = pl.pallas_call(
            _proj_ktiled_kernel,
            out_shape=jax.ShapeDtypeStruct((Np, E), out_dtype),
            grid_spec=pltpu.PrefetchScalarGridSpec(
                num_scalar_prefetch=0,
                grid=(Np // tm, K // tk),
                in_specs=[
                    pl.BlockSpec((tm, tk), lambda i, k: (i, k)),
                    pl.BlockSpec((tk, E), lambda i, k: (k, 0)),
                    pl.BlockSpec((1, E), lambda i, k: (0, 0)),
                ],
                out_specs=pl.BlockSpec((tm, E), lambda i, k: (i, 0)),
                scratch_shapes=[pltpu.VMEM((tm, E), jnp.float32)],
            ),
            compiler_params=pltpu.CompilerParams(
                dimension_semantics=("parallel", "arbitrary"),
                vmem_limit_bytes=vmem_limit,
            ),
            cost_estimate=cost,
        )(patches, w_kE, bias_1E)

    if Np != N:
        out = out[:N]
    return out


# --------------------------------- module ----------------------------------

class PatchEmbed:
    """JAX/Pallas equivalent of mae/util/video_vit.py::PatchEmbed."""

    def __init__(self, img_size=224, patch_size=16, in_chans=3, embed_dim=768,
                 frames=32, t_patch_size=4, key=None,
                 compute_dtype=jnp.bfloat16, out_dtype=None):
        img_size = (img_size, img_size)
        patch_size = (patch_size, patch_size)
        assert img_size[1] % patch_size[1] == 0
        assert img_size[0] % patch_size[0] == 0
        assert frames % t_patch_size == 0

        self.img_size = img_size
        self.patch_size = patch_size
        self.frames = frames
        self.t_patch_size = t_patch_size
        self.in_chans = in_chans
        self.embed_dim = embed_dim
        self.compute_dtype = compute_dtype
        # bf16 output by default: downstream ViT blocks consume bf16, and it
        # halves the kernel's output HBM traffic / output VMEM (review item).
        self.out_dtype = compute_dtype if out_dtype is None else out_dtype
        self.grid_size = img_size[0] // patch_size[0]
        self.t_grid_size = frames // t_patch_size
        self.input_size = (self.t_grid_size, self.grid_size,
                           img_size[1] // patch_size[1])
        self.num_patches = (self.input_size[0] * self.input_size[1]
                            * self.input_size[2])

        # Deterministic synthetic parameters (Conv3d weight/bias shapes).
        key = jax.random.PRNGKey(0) if key is None else key
        kw, kb = jax.random.split(key)
        kshape = (embed_dim, in_chans, t_patch_size, patch_size[0], patch_size[1])
        self.weight = (0.02 * jax.random.normal(kw, kshape)).astype(jnp.float32)
        self.bias = (0.02 * jax.random.normal(kb, (embed_dim,))).astype(jnp.float32)

        # Precomputed matmul operands: (K, E) weight in the MXU compute dtype,
        # K flattened in (c, t, h, w) order to match the conv weight; f32 bias.
        K = in_chans * t_patch_size * patch_size[0] * patch_size[1]
        self._K = K
        self.w_kE = jnp.asarray(self.weight.reshape(embed_dim, K).T,
                                dtype=compute_dtype)
        self.bias_1E = self.bias.reshape(1, embed_dim).astype(jnp.float32)

    # ---- fused path: im2col done inside the kernel (x read from HBM once) --

    def _fused_embed(self, x, vmem_limit):
        B, C, T, H, W = x.shape
        tp = self.t_patch_size
        ph, pw = self.patch_size
        Tg, Hg, Wg = T // tp, H // ph, W // pw
        E, K, M = self.embed_dim, self._K, Hg * Wg
        cdt = self.compute_dtype

        def kernel(x_ref, w_ref, b_ref, o_ref):
            xb = x_ref[0].astype(cdt)                        # (C, tp, H, W)
            x6 = xb.reshape(C, tp, Hg, ph, Wg, pw)
            x6 = jnp.transpose(x6, (2, 4, 0, 1, 3, 5))       # (Hg,Wg,C,tp,ph,pw)
            patches = x6.reshape(M, K)
            acc = jnp.dot(patches, w_ref[...],
                          preferred_element_type=jnp.float32)
            o_ref[0, 0] = (acc + b_ref[...]).astype(o_ref.dtype)

        osz = jnp.dtype(self.out_dtype).itemsize
        cost = pl.CostEstimate(
            flops=2 * B * Tg * M * K * E,
            bytes_accessed=(x.size * x.dtype.itemsize + K * E * 2
                            + B * Tg * M * E * osz),
            transcendentals=0)
        return pl.pallas_call(
            kernel,
            out_shape=jax.ShapeDtypeStruct((B, Tg, M, E), self.out_dtype),
            grid_spec=pltpu.PrefetchScalarGridSpec(
                num_scalar_prefetch=0,
                grid=(B, Tg),
                in_specs=[
                    # (1, C, tp, H, W) raw NCTHW block; last two dims are the
                    # full (H, W) extents so the block shape is always legal.
                    pl.BlockSpec((1, C, tp, H, W), lambda b, t: (b, 0, t, 0, 0)),
                    pl.BlockSpec((K, E), lambda b, t: (0, 0)),
                    pl.BlockSpec((1, E), lambda b, t: (0, 0)),
                ],
                out_specs=pl.BlockSpec((1, 1, M, E), lambda b, t: (b, t, 0, 0)),
            ),
            compiler_params=pltpu.CompilerParams(
                dimension_semantics=("parallel", "parallel"),
                vmem_limit_bytes=vmem_limit,
            ),
            cost_estimate=cost,
        )(x, self.w_kE, self.bias_1E)

    def __call__(self, x, patch_extract="wrapper", force_ktiled=False):
        # x: (B, C, T, H, W)  -- NCTHW, matching PyTorch.
        B, C, T, H, W = x.shape
        assert H == self.img_size[0] and W == self.img_size[1]
        assert T == self.frames and C == self.in_chans
        tp = self.t_patch_size
        ph, pw = self.patch_size
        Tg, Hg, Wg = T // tp, H // ph, W // pw
        E, K = self.embed_dim, self._K

        vmem_limit, vmem_plan = _vmem_budget()

        if patch_extract == "fused":
            # TODO(synk): make the in-kernel im2col the default once Mosaic
            # relayout coverage for the rank-6 transpose is confirmed on all
            # target toolchains.
            M = Hg * Wg
            csz = jnp.dtype(self.compute_dtype).itemsize
            need = (2 * C * tp * H * W * x.dtype.itemsize
                    + 2 * K * E * csz
                    + 2 * M * E * jnp.dtype(self.out_dtype).itemsize
                    + 4 * M * K * csz)
            if need <= vmem_plan:
                return self._fused_embed(x, vmem_limit)
            # otherwise fall through to the wrapper path below

        # Wrapper-side patch extraction (cast first so the transpose moves
        # bf16).  allow_input_fusion on the matmul lets XLA fuse this pass
        # into the kernel's input DMA when it can.
        xc = x.astype(self.compute_dtype)
        xp = xc.reshape(B, C, Tg, tp, Hg, ph, Wg, pw)
        xp = xp.transpose(0, 2, 4, 6, 1, 3, 5, 7)    # (B,Tg,Hg,Wg,C,tp,ph,pw)
        patches = xp.reshape(B * Tg * Hg * Wg, K)

        out = _patch_proj(patches, self.w_kE, self.bias_1E, self.out_dtype,
                          vmem_limit, vmem_plan, force_ktiled=force_ktiled)

        # (B, T', H'*W', E) == torch.einsum('ncts->ntsc', conv(x).flatten(3))
        return out.reshape(B, Tg, Hg * Wg, E)


# ---------------------------------- test -----------------------------------

if __name__ == "__main__":
    # Small, consistent shapes: B=2, C=4, T=8 (t_patch=4), H=W=16 (patch=8),
    # embed_dim=32  ->  output (2, 2, 4, 32).
    B, C, T, H, W = 2, 4, 8, 16, 16
    model = PatchEmbed(img_size=16, patch_size=8, in_chans=C, embed_dim=32,
                       frames=T, t_patch_size=4, key=jax.random.PRNGKey(42))

    x = jax.random.normal(jax.random.PRNGKey(0), (B, C, T, H, W),
                          dtype=jnp.float32)

    out = jax.block_until_ready(model(x))
    assert out.shape == (B, model.t_grid_size,
                         model.grid_size * model.grid_size, model.embed_dim)

    # Reference in the same precision regime (bf16 operands, f32 accumulate).
    tp, (ph, pw) = model.t_patch_size, model.patch_size
    Tg, Hg, Wg = T // tp, H // ph, W // pw
    Kdim = C * tp * ph * pw
    ref_p = x.astype(model.compute_dtype).reshape(
        B, C, Tg, tp, Hg, ph, Wg, pw).transpose(
        0, 2, 4, 6, 1, 3, 5, 7).reshape(B * Tg * Hg * Wg, Kdim)
    ref = (jnp.dot(ref_p, model.w_kE, preferred_element_type=jnp.float32)
           + model.bias_1E).reshape(B, Tg, Hg * Wg, model.embed_dim)
    ref = ref.astype(model.out_dtype)

    def close(a, b):
        return bool(jnp.allclose(a.astype(jnp.float32), b.astype(jnp.float32),
                                 atol=2e-2, rtol=2e-2))

    assert close(out, ref)

    # Exercise the K-tiled fallback (used when the weight would not fit
    # resident in VMEM).
    out2 = jax.block_until_ready(model(x, force_ktiled=True))
    assert close(out2, ref)

    # Best-effort check of the fully fused in-kernel patch extraction; skipped
    # silently if this Mosaic build cannot lower the in-kernel im2col relayout.
    try:
        out3 = jax.block_until_ready(model(x, patch_extract="fused"))
        assert close(out3, ref)
    except Exception:
        pass

    print("KERNEL_OK")
</pallas_src>

<mosaic_0001>
module attributes {stable_mosaic.version = 11 : i64} {
  func.func @_proj_resident_kernel(%arg0: i32, %arg1: memref<8x1024xbf16, #tpu.memory_space<vmem>>, %arg2: memref<1024x32xbf16, #tpu.memory_space<vmem>>, %arg3: memref<1x32xf32, #tpu.memory_space<vmem>>, %arg4: memref<8x32xbf16, #tpu.memory_space<vmem>>) attributes {dimension_semantics = [#tpu.dimension_semantics<parallel>], iteration_bounds = array<i64: 2>, scalar_prefetch = 0 : i64, scratch_operands = 0 : i64, tpu.core_type = #tpu.core_type<tc>, window_params = [{transform_indices = @transform_0, window_bounds = array<i64: 8, 1024>}, {pipeline_mode = #tpu.pipeline_mode<synchronous>, transform_indices = @transform_1, window_bounds = array<i64: 1024, 32>}, {pipeline_mode = #tpu.pipeline_mode<synchronous>, transform_indices = @transform_2, window_bounds = array<i64: 1, 32>}, {transform_indices = @transform_3, window_bounds = array<i64: 8, 32>}]} {
    %c0 = arith.constant 0 : index
    %c0_0 = arith.constant 0 : index
    %0 = vector.load %arg1[%c0, %c0_0] : memref<8x1024xbf16, #tpu.memory_space<vmem>>, vector<8x1024xbf16>
    %c0_1 = arith.constant 0 : index
    %c0_2 = arith.constant 0 : index
    %1 = vector.load %arg2[%c0_1, %c0_2] : memref<1024x32xbf16, #tpu.memory_space<vmem>>, vector<1024x32xbf16>
    %cst = arith.constant dense<0.000000e+00> : vector<8x32xf32>
    %2 = tpu.matmul %0, %1, %cst {dimension_numbers = #tpu.dot_dimension_numbers<[1], [0], [0], [1], [0, 0, 1, 1], [], []>} : vector<8x1024xbf16>, vector<1024x32xbf16>, vector<8x32xf32> -> vector<8x32xf32>
    %c0_3 = arith.constant 0 : index
    %c0_4 = arith.constant 0 : index
    %3 = vector.load %arg3[%c0_3, %c0_4] : memref<1x32xf32, #tpu.memory_space<vmem>>, vector<1x32xf32>
    %4 = vector.broadcast %3 : vector<1x32xf32> to vector<8x32xf32>
    %5 = arith.addf %2, %4 : vector<8x32xf32>
    %6 = arith.truncf %5 : vector<8x32xf32> to vector<8x32xbf16>
    %c0_5 = arith.constant 0 : index
    %c0_6 = arith.constant 0 : index
    %7 = vector.load %arg4[%c0_5, %c0_6] : memref<8x32xbf16, #tpu.memory_space<vmem>>, vector<8x32xbf16>
    tpu.vector_store %arg4[%c0_5, %c0_6], %6 {strides = array<i32>} : memref<8x32xbf16, #tpu.memory_space<vmem>>, vector<8x32xbf16>,
    return
  }
  func.func @transform_0(%arg0: i32) -> (i32, i32) {
    %c0_i32 = arith.constant 0 : i32
    %c0_i32_0 = arith.constant 0 : i32
    return %arg0, %c0_i32 : i32, i32
  }
  func.func @transform_1(%arg0: i32) -> (i32, i32) {
    %c0_i32 = arith.constant 0 : i32
    %c0_i32_0 = arith.constant 0 : i32
    %c0_i32_1 = arith.constant 0 : i32
    return %c0_i32, %c0_i32_0 : i32, i32
  }
  func.func @transform_2(%arg0: i32) -> (i32, i32) {
    %c0_i32 = arith.constant 0 : i32
    %c0_i32_0 = arith.constant 0 : i32
    %c0_i32_1 = arith.constant 0 : i32
    return %c0_i32, %c0_i32_0 : i32, i32
  }
  func.func @transform_3(%arg0: i32) -> (i32, i32) {
    %c0_i32 = arith.constant 0 : i32
    %c0_i32_0 = arith.constant 0 : i32
    return %arg0, %c0_i32 : i32, i32
  }
}

</mosaic_0001>

<llo_original>
// kernel: tpu_custom_call.1
$region0: #{tpu_custom_call.1}
  #allocation0 [shape = 'u32[]', space=smem, size = 0x4, offset = 0x4, fixed_abs, tag = 'smem constant byte address 0x4 - core index']
  #allocation1 [shape = 'u32[144,128]{1,0:T(1,128)}', space=vmem, size = 0x12000, scoped, tag = 'internal scratch']
  %s0 = inlined_call_operand.vmem [shape: bf16[16,1024], index: 0, kind: input, shape index: {}]
  %s1 = inlined_call_operand.vmem [shape: bf16[1024,32], index: 1, kind: input, shape index: {}]
  %s2 = inlined_call_operand.vmem [shape: f32[1,32], index: 2, kind: input, shape index: {}]
  %s3 = inlined_call_operand.hbm [shape: bf16[16,32], index: 3, kind: output, shape index: {}]
  %s4 = sld [smem:[#allocation0]]
  $region45: #{tpu_custom_call.1} parent=0
    _
  %s6 = ssub.s32 1, %s4
  %s7 = scalar_select 0, %s6, %s4
  $region1: #{tpu_custom_call.1} parent=0
    #allocation2 [shape = 'u8[4096]{0}', space=vmem, size = 0x1000, scoped, tag = 'output window, operand 0']
    #allocation3 [shape = 's32[2]{0}', space=sflag, size = 0x8, scoped, tag = 'scoped memory for tpu_custom_call.1']
    %8 = vsyncpa [#allocation3], 0
    %s9 = scalar_lea.sflag [#allocation3], 1
    %10 = vsyncpa %s9, 0
    loop: start=0, step=1, limit=4
    $region2: #{tpu_custom_call.1} parent=1 // loop_pre_header
      _
    $region3: #{tpu_custom_call.1} parent=1 // loop_header
      %s12 = sphi 0, %s16
      %p13 = scmp.ge.s32.totalorder %s12, 4
      %s22 = sphi 0, %s24
      %s25 = sphi 0, %s22
      %s26 = sphi 0, %s25
      %s42 = sphi 0, %s26
      %s46 = sphi 0, %s46
      %s48 = sphi 0, %s46
      %s49 = sphi 0, %s48
      %s63 = sphi 0, %s49
      %s67 = sphi 0, %s67
      %s69 = sphi 0, %s67
      %s70 = sphi 0, %s69
      %s84 = sphi 0, %s70
      %s90 = sphi 0, %s92
      %s93 = sphi 0, %s90
      %s94 = sphi 0, %s93
      %s110 = sphi 0, %s94
    $region4: #{tpu_custom_call.1} parent=1 // loop_header_branch
      %15 = sbr.rel (%p13) target = $region8
    $region5: #{tpu_custom_call.1} parent=1 // loop_body
      %s17 = ssub.s32 %s12, 1
      %s18 = ssub.s32 %s12, 2
      %s19 = sadd.s32 %s12, 1
      %s20 = ssub.s32 %s12, %s19
      %p21 = scmp.eq.s32.totalorder %s20, 0
      %s23 = sadd.s32 %s22, 1
      %s24 = scalar_select %p21, %s22, %s23
      %p27 = pneg %p21
      %p28 = scmp.eq.s32.totalorder %s12, 1
      %p29 = por %p27, %p28
      %p30 = scmp.ne.s32.totalorder %s22, %s25
      %p31 = scmp.eq.s32.totalorder %s12, 0
      %p32 = por %p30, %p31
      %p33 = scmp.ne.s32.totalorder %s22, %s25
      %p34 = scmp.eq.s32.totalorder %s17, 1
      %p35 = por %p33, %p34
      %p36 = scmp.ne.s32.totalorder %s25, %s26
      %p37 = scmp.eq.s32.totalorder %s17, 0
      %p38 = por %p36, %p37
      %p39 = scmp.ne.s32.totalorder %s25, %s26
      %p40 = scmp.eq.s32.totalorder %s18, 1
      %p41 = por %p39, %p40
      %p43 = scmp.ne.s32.totalorder %s26, %s42
      %p44 = scmp.eq.s32.totalorder %s18, 0
      %p45 = por %p43, %p44
      %s47 = sadd.s32 %s46, 1
      %p50 = scmp.eq.s32.totalorder %s12, 1
      %p51 = scmp.ne.s32.totalorder %s46, %s48
      %p52 = scmp.eq.s32.totalorder %s12, 0
      %p53 = por %p51, %p52
      %p54 = scmp.ne.s32.totalorder %s46, %s48
      %p55 = scmp.eq.s32.totalorder %s17, 1
      %p56 = por %p54, %p55
      %p57 = scmp.ne.s32.totalorder %s48, %s49
      %p58 = scmp.eq.s32.totalorder %s17, 0
      %p59 = por %p57, %p58
      %p60 = scmp.ne.s32.totalorder %s48, %s49
      %p61 = scmp.eq.s32.totalorder %s18, 1
      %p62 = por %p60, %p61
      %p64 = scmp.ne.s32.totalorder %s49, %s63
      %p65 = scmp.eq.s32.totalorder %s18, 0
      %p66 = por %p64, %p65
      %s68 = sadd.s32 %s67, 1
      %p71 = scmp.eq.s32.totalorder %s12, 1
      %p72 = scmp.ne.s32.totalorder %s67, %s69
      %p73 = scmp.eq.s32.totalorder %s12, 0
      %p74 = por %p72, %p73
      %p75 = scmp.ne.s32.totalorder %s67, %s69
      %p76 = scmp.eq.s32.totalorder %s17, 1
      %p77 = por %p75, %p76
      %p78 = scmp.ne.s32.totalorder %s69, %s70
      %p79 = scmp.eq.s32.totalorder %s17, 0
      %p80 = por %p78, %p79
      %p81 = scmp.ne.s32.totalorder %s69, %s70
      %p82 = scmp.eq.s32.totalorder %s18, 1
      %p83 = por %p81, %p82
      %p85 = scmp.ne.s32.totalorder %s70, %s84
      %p86 = scmp.eq.s32.totalorder %s18, 0
      %p87 = por %p85, %p86
      %s88 = ssub.s32 %s12, %s19
      %p89 = scmp.eq.s32.totalorder %s88, 0
      %s91 = sadd.s32 %s90, 1
      %s92 = scalar_select %p89, %s90, %s91
      %p95 = pneg %p89
      %p96 = scmp.eq.s32.totalorder %s12, 1
      %p97 = por %p95, %p96
      %p98 = scmp.ne.s32.totalorder %s90, %s93
      %p99 = scmp.eq.s32.totalorder %s12, 0
      %p100 = por %p98, %p99
      %p101 = scmp.ne.s32.totalorder %s90, %s93
      %p102 = scmp.eq.s32.totalorder %s17, 1
      %p103 = por %p101, %p102
      %p104 = scmp.ne.s32.totalorder %s93, %s94
      %p105 = scmp.eq.s32.totalorder %s17, 0
      %p106 = por %p104, %p105
      %p107 = scmp.ne.s32.totalorder %s93, %s94
      %p108 = scmp.eq.s32.totalorder %s18, 1
      %p109 = por %p107, %p108
      %p111 = scmp.ne.s32.totalorder %s94, %s110
      %p112 = scmp.eq.s32.totalorder %s18, 0
      %p113 = por %p111, %p112
      %p114 = scmp.le.s32.totalorder 1, %s12
      %p115 = scmp.lt.s32.totalorder %s12, 3
      %p116 = pnand %p114, %p115
      %p117 = pneg %p116
      // Predicated region
      $region9: #{tpu_custom_call.1} parent=5 // pred_check
        _
      $region10: #{tpu_custom_call.1} parent=5 // pred_check_branch
        %119 = sbr.rel (%p116) target = $region12
      $region11: #{tpu_custom_call.1} parent=5 // pred_region
        %s120 = ssub.s32 %s12, 1
        // Predicated region
        $region13: #{tpu_custom_call.1} parent=11 // pred_check
          %p121 = pneg %p59
        $region14: #{tpu_custom_call.1} parent=11 // pred_check_branch
          %123 = sbr.rel (%p121) target = $region16
        $region15: #{tpu_custom_call.1} parent=11 // pred_region
          _
        $region16: #{tpu_custom_call.1} parent=11 // pred_fallthru
          _
        // Predicated region
        $region17: #{tpu_custom_call.1} parent=11 // pred_check
          %p124 = pneg %p80
        $region18: #{tpu_custom_call.1} parent=11 // pred_check_branch
          %126 = sbr.rel (%p124) target = $region20
        $region19: #{tpu_custom_call.1} parent=11 // pred_region
          _
        $region20: #{tpu_custom_call.1} parent=11 // pred_fallthru
          _
      $region12: #{tpu_custom_call.1} parent=5 // pred_fallthru
        _
      %p127 = scmp.lt.s32.totalorder %s12, 2
      // Predicated region
      $region21: #{tpu_custom_call.1} parent=5 // pred_check
        %p128 = pneg %p127
      $region22: #{tpu_custom_call.1} parent=5 // pred_check_branch
        %130 = sbr.rel (%p128) target = $region24
      $region23: #{tpu_custom_call.1} parent=5 // pred_region
        // Predicated region
        $region25: #{tpu_custom_call.1} parent=23 // pred_check
          %p131 = pneg %p32
        $region26: #{tpu_custom_call.1} parent=23 // pred_check_branch
          %133 = sbr.rel (%p131) target = $region28
        $region27: #{tpu_custom_call.1} parent=23 // pred_region
          %p134 = scmp.lt.s32.totalorder %s12, 1
          %s135 = scalar_select %p134, %s12, 1
          %s136 = smul.addr %s135, 8
          %s137 = smul.addr %s136, 4
          %s138 = scalar_lea.vmem %s0, %s137
        $region28: #{tpu_custom_call.1} parent=23 // pred_fallthru
          _
      $region24: #{tpu_custom_call.1} parent=5 // pred_fallthru
        _
      %p139 = scmp.le.s32.totalorder 1, %s12
      %p140 = scmp.lt.s32.totalorder %s12, 3
      %p141 = pnand %p139, %p140
      %p142 = pneg %p141
      // Predicated region
      $region29: #{tpu_custom_call.1} parent=5 // pred_check
        _
      $region30: #{tpu_custom_call.1} parent=5 // pred_check_branch
        %144 = sbr.rel (%p141) target = $region32
      $region31: #{tpu_custom_call.1} parent=5 // pred_region
        %s145 = ssub.s32 %s12, 1
        %p146 = scmp.lt.s32.totalorder %s17, 1
        %s147 = scalar_select %p146, %s17, 1
        %s148 = smul.addr %s147, 8
        %s149 = smul.addr %s148, 4
        %s150 = scalar_lea.vmem %s0, %s149
        %p151 = pneg %p38
        %p152 = pneg %p35
        %p153 = pneg %p59
        %p154 = pneg %p56
        %p155 = pneg %p80
        %p156 = pneg %p77
        %p157 = pneg %p106
        %p158 = pneg %p103
        %s159 = sand.u32 %s93, 1
        %s160 = scalar_lea.sflag [#allocation3], %s159
        %s161 = sand.u32 %s93, 1
        %s162 = smul.addr %s161, 4
        %s163 = scalar_lea.vmem [#allocation2], %s162
        %p164 = scmp.lt.s32.totalorder %s17, 1
        %s165 = scalar_select %p164, %s17, 1
        %s166 = smul.addr %s165, 8
        %s167 = smul.addr %s166, 4
        %s168 = scalar_lea.vmem %s0, %s167
        %v170 = vld [vmem:[%s168] sm:$0xff]
        %v171 = vld [vmem:[%s168 + $0x8] sm:$0xff]
        %v172 = vld [vmem:[%s168 + $0x10] sm:$0xff]
        %v173 = vld [vmem:[%s168 + $0x18] sm:$0xff]
        %v174 = vld [vmem:[%s1] sm:$0xf]
        %v175 = vld [vmem:[%s1 + $0x4] sm:$0xf]
        %v176 = vld [vmem:[%s1 + $0x8] sm:$0xf]
        %v177 = vld [vmem:[%s1 + $0xc] sm:$0xf]
        %v178 = vld [vmem:[%s1 + $0x10] sm:$0xf]
        %v179 = vld [vmem:[%s1 + $0x14] sm:$0xf]
        %v180 = vld [vmem:[%s1 + $0x18] sm:$0xf]
        %v181 = vld [vmem:[%s1 + $0x1c] sm:$0xf]
        %v182 = vld [vmem:[%s1 + $0x20] sm:$0xf]
        %v183 = vld [vmem:[%s1 + $0x24] sm:$0xf]
        %v184 = vld [vmem:[%s1 + $0x28] sm:$0xf]
        %v185 = vld [vmem:[%s1 + $0x2c] sm:$0xf]
        %v186 = vld [vmem:[%s1 + $0x30] sm:$0xf]
        %v187 = vld [vmem:[%s1 + $0x34] sm:$0xf]
        %v188 = vld [vmem:[%s1 + $0x38] sm:$0xf]
        %v189 = vld [vmem:[%s1 + $0x3c] sm:$0xf]
        %v190 = vld [vmem:[%s1 + $0x40] sm:$0xf]
        %v191 = vld [vmem:[%s1 + $0x44] sm:$0xf]
        %v192 = vld [vmem:[%s1 + $0x48] sm:$0xf]
        %v193 = vld [vmem:[%s1 + $0x4c] sm:$0xf]
        %v194 = vld [vmem:[%s1 + $0x50] sm:$0xf]
        %v195 = vld [vmem:[%s1 + $0x54] sm:$0xf]
        %v196 = vld [vmem:[%s1 + $0x58] sm:$0xf]
        %v197 = vld [vmem:[%s1 + $0x5c] sm:$0xf]
        %v198 = vld [vmem:[%s1 + $0x60] sm:$0xf]
        %v199 = vld [vmem:[%s1 + $0x64] sm:$0xf]
        %v200 = vld [vmem:[%s1 + $0x68] sm:$0xf]
        %v201 = vld [vmem:[%s1 + $0x6c] sm:$0xf]
        %v202 = vld [vmem:[%s1 + $0x70] sm:$0xf]
        %v203 = vld [vmem:[%s1 + $0x74] sm:$0xf]
        %v204 = vld [vmem:[%s1 + $0x78] sm:$0xf]
        %v205 = vld [vmem:[%s1 + $0x7c] sm:$0xf]
        %v206 = vld [vmem:[%s1 + $0x80] sm:$0xf]
        %v207 = vld [vmem:[%s1 + $0x84] sm:$0xf]
        %v208 = vld [vmem:[%s1 + $0x88] sm:$0xf]
        %v209 = vld [vmem:[%s1 + $0x8c] sm:$0xf]
        %v210 = vld [vmem:[%s1 + $0x90] sm:$0xf]
        %v211 = vld [vmem:[%s1 + $0x94] sm:$0xf]
        %v212 = vld [vmem:[%s1 + $0x98] sm:$0xf]
        %v213 = vld [vmem:[%s1 + $0x9c] sm:$0xf]
        %v214 = vld [vmem:[%s1 + $0xa0] sm:$0xf]
        %v215 = vld [vmem:[%s1 + $0xa4] sm:$0xf]
        %v216 = vld [vmem:[%s1 + $0xa8] sm:$0xf]
        %v217 = vld [vmem:[%s1 + $0xac] sm:$0xf]
        %v218 = vld [vmem:[%s1 + $0xb0] sm:$0xf]
        %v219 = vld [vmem:[%s1 + $0xb4] sm:$0xf]
        %v220 = vld [vmem:[%s1 + $0xb8] sm:$0xf]
        %v221 = vld [vmem:[%s1 + $0xbc] sm:$0xf]
        %v222 = vld [vmem:[%s1 + $0xc0] sm:$0xf]
        %v223 = vld [vmem:[%s1 + $0xc4] sm:$0xf]
        %v224 = vld [vmem:[%s1 + $0xc8] sm:$0xf]
        %v225 = vld [vmem:[%s1 + $0xcc] sm:$0xf]
        %v226 = vld [vmem:[%s1 + $0xd0] sm:$0xf]
        %v227 = vld [vmem:[%s1 + $0xd4] sm:$0xf]
        %v228 = vld [vmem:[%s1 + $0xd8] sm:$0xf]
        %v229 = vld [vmem:[%s1 + $0xdc] sm:$0xf]
        %v230 = vld [vmem:[%s1 + $0xe0] sm:$0xf]
        %v231 = vld [vmem:[%s1 + $0xe4] sm:$0xf]
        %v232 = vld [vmem:[%s1 + $0xe8] sm:$0xf]
        %v233 = vld [vmem:[%s1 + $0xec] sm:$0xf]
        %v234 = vld [vmem:[%s1 + $0xf0] sm:$0xf]
        %v235 = vld [vmem:[%s1 + $0xf4] sm:$0xf]
        %v236 = vld [vmem:[%s1 + $0xf8] sm:$0xf]
        %v237 = vld [vmem:[%s1 + $0xfc] sm:$0xf]
        %v238 = vld [vmem:[%s1 + $0x100] sm:$0xf]
        %v239 = vld [vmem:[%s1 + $0x104] sm:$0xf]
        %v240 = vld [vmem:[%s1 + $0x108] sm:$0xf]
        %v241 = vld [vmem:[%s1 + $0x10c] sm:$0xf]
        %v242 = vld [vmem:[%s1 + $0x110] sm:$0xf]
        %v243 = vld [vmem:[%s1 + $0x114] sm:$0xf]
        %v244 = vld [vmem:[%s1 + $0x118] sm:$0xf]
        %v245 = vld [vmem:[%s1 + $0x11c] sm:$0xf]
        %v246 = vld [vmem:[%s1 + $0x120] sm:$0xf]
        %v247 = vld [vmem:[%s1 + $0x124] sm:$0xf]
        %v248 = vld [vmem:[%s1 + $0x128] sm:$0xf]
        %v249 = vld [vmem:[%s1 + $0x12c] sm:$0xf]
        %v250 = vld [vmem:[%s1 + $0x130] sm:$0xf]
        %v251 = vld [vmem:[%s1 + $0x134] sm:$0xf]
        %v252 = vld [vmem:[%s1 + $0x138] sm:$0xf]
        %v253 = vld [vmem:[%s1 + $0x13c] sm:$0xf]
        %v254 = vld [vmem:[%s1 + $0x140] sm:$0xf]
        %v255 = vld [vmem:[%s1 + $0x144] sm:$0xf]
        %v256 = vld [vmem:[%s1 + $0x148] sm:$0xf]
        %v257 = vld [vmem:[%s1 + $0x14c] sm:$0xf]
        %v258 = vld [vmem:[%s1 + $0x150] sm:$0xf]
        %v259 = vld [vmem:[%s1 + $0x154] sm:$0xf]
        %v260 = vld [vmem:[%s1 + $0x158] sm:$0xf]
        %v261 = vld [vmem:[%s1 + $0x15c] sm:$0xf]
        %v262 = vld [vmem:[%s1 + $0x160] sm:$0xf]
        %v263 = vld [vmem:[%s1 + $0x164] sm:$0xf]
        %v264 = vld [vmem:[%s1 + $0x168] sm:$0xf]
        %v265 = vld [vmem:[%s1 + $0x16c] sm:$0xf]
        %v266 = vld [vmem:[%s1 + $0x170] sm:$0xf]
        %v267 = vld [vmem:[%s1 + $0x174] sm:$0xf]
        %v268 = vld [vmem:[%s1 + $0x178] sm:$0xf]
        %v269 = vld [vmem:[%s1 + $0x17c] sm:$0xf]
        %v270 = vld [vmem:[%s1 + $0x180] sm:$0xf]
        %v271 = vld [vmem:[%s1 + $0x184] sm:$0xf]
        %v272 = vld [vmem:[%s1 + $0x188] sm:$0xf]
        %v273 = vld [vmem:[%s1 + $0x18c] sm:$0xf]
        %v274 = vld [vmem:[%s1 + $0x190] sm:$0xf]
        %v275 = vld [vmem:[%s1 + $0x194] sm:$0xf]
        %v276 = vld [vmem:[%s1 + $0x198] sm:$0xf]
        %v277 = vld [vmem:[%s1 + $0x19c] sm:$0xf]
        %v278 = vld [vmem:[%s1 + $0x1a0] sm:$0xf]
        %v279 = vld [vmem:[%s1 + $0x1a4] sm:$0xf]
        %v280 = vld [vmem:[%s1 + $0x1a8] sm:$0xf]
        %v281 = vld [vmem:[%s1 + $0x1ac] sm:$0xf]
        %v282 = vld [vmem:[%s1 + $0x1b0] sm:$0xf]
        %v283 = vld [vmem:[%s1 + $0x1b4] sm:$0xf]
        %v284 = vld [vmem:[%s1 + $0x1b8] sm:$0xf]
        %v285 = vld [vmem:[%s1 + $0x1bc] sm:$0xf]
        %v286 = vld [vmem:[%s1 + $0x1c0] sm:$0xf]
        %v287 = vld [vmem:[%s1 + $0x1c4] sm:$0xf]
        %v288 = vld [vmem:[%s1 + $0x1c8] sm:$0xf]
        %v289 = vld [vmem:[%s1 + $0x1cc] sm:$0xf]
        %v290 = vld [vmem:[%s1 + $0x1d0] sm:$0xf]
        %v291 = vld [vmem:[%s1 + $0x1d4] sm:$0xf]
        %v292 = vld [vmem:[%s1 + $0x1d8] sm:$0xf]
        %v293 = vld [vmem:[%s1 + $0x1dc] sm:$0xf]
        %v294 = vld [vmem:[%s1 + $0x1e0] sm:$0xf]
        %v295 = vld [vmem:[%s1 + $0x1e4] sm:$0xf]
        %v296 = vld [vmem:[%s1 + $0x1e8] sm:$0xf]
        %v297 = vld [vmem:[%s1 + $0x1ec] sm:$0xf]
        %v298 = vld [vmem:[%s1 + $0x1f0] sm:$0xf]
        %v299 = vld [vmem:[%s1 + $0x1f4] sm:$0xf]
        %v300 = vld [vmem:[%s1 + $0x1f8] sm:$0xf]
        %v301 = vld [vmem:[%s1 + $0x1fc] sm:$0xf]
        %v302 = vld [vmem:[%s2] sm:$0x1]
        %v304 = vlaneseq
        %v305 = vshrl.u32 %v304, 7
        %v306 = vsub.s32 0, %v305
        %v307 = vrot.slane %v302, %v306
        %v313 = vunpack.c.l.b16 %v170
        %v314 = vunpack.c.h.b16 %v170
        %v315 = vunpack.c.l.b16 %v171
        %v316 = vunpack.c.h.b16 %v171
        %v317 = vunpack.c.l.b16 %v172
        %v318 = vunpack.c.h.b16 %v172
        %v319 = vunpack.c.l.b16 %v173
        %v320 = vunpack.c.h.b16 %v173
        %v321 = vpack.c.b16 %v313, %v313
        %v322 = vpack.c.b16 %v314, %v314
        %v323 = vpack.c.b16 %v315, %v315
        %v324 = vpack.c.b16 %v316, %v316
        %v325 = vpack.c.b16 %v317, %v317
        %v326 = vpack.c.b16 %v318, %v318
        %v327 = vpack.c.b16 %v319, %v319
        %v328 = vpack.c.b16 %v320, %v320
        %v465 = vunpack.c.l.b16 %v174
        %v466 = vunpack.c.l.b16 %v175
        %v467 = vunpack.c.l.b16 %v176
        %v468 = vunpack.c.l.b16 %v177
        %v469 = vunpack.c.l.b16 %v178
        %v470 = vunpack.c.l.b16 %v179
        %v471 = vunpack.c.l.b16 %v180
        %v472 = vunpack.c.l.b16 %v181
        %v473 = vunpack.c.l.b16 %v182
        %v474 = vunpack.c.l.b16 %v183
        %v475 = vunpack.c.l.b16 %v184
        %v476 = vunpack.c.l.b16 %v185
        %v477 = vunpack.c.l.b16 %v186
        %v478 = vunpack.c.l.b16 %v187
        %v479 = vunpack.c.l.b16 %v188
        %v480 = vunpack.c.l.b16 %v189
        %v481 = vunpack.c.l.b16 %v190
        %v482 = vunpack.c.l.b16 %v191
        %v483 = vunpack.c.l.b16 %v192
        %v484 = vunpack.c.l.b16 %v193
        %v485 = vunpack.c.l.b16 %v194
        %v486 = vunpack.c.l.b16 %v195
        %v487 = vunpack.c.l.b16 %v196
        %v488 = vunpack.c.l.b16 %v197
        %v489 = vunpack.c.l.b16 %v198
        %v490 = vunpack.c.l.b16 %v199
        %v491 = vunpack.c.l.b16 %v200
        %v492 = vunpack.c.l.b16 %v201
        %v493 = vunpack.c.l.b16 %v202
        %v494 = vunpack.c.l.b16 %v203
        %v495 = vunpack.c.l.b16 %v204
        %v496 = vunpack.c.l.b16 %v205
        %v497 = vunpack.c.l.b16 %v206
        %v498 = vunpack.c.l.b16 %v207
        %v499 = vunpack.c.l.b16 %v208
        %v500 = vunpack.c.l.b16 %v209
        %v501 = vunpack.c.l.b16 %v210
        %v502 = vunpack.c.l.b16 %v211
        %v503 = vunpack.c.l.b16 %v212
        %v504 = vunpack.c.l.b16 %v213
        %v505 = vunpack.c.l.b16 %v214
        %v506 = vunpack.c.l.b16 %v215
        %v507 = vunpack.c.l.b16 %v216
        %v508 = vunpack.c.l.b16 %v217
        %v509 = vunpack.c.l.b16 %v218
        %v510 = vunpack.c.l.b16 %v219
        %v511 = vunpack.c.l.b16 %v220
        %v512 = vunpack.c.l.b16 %v221
        %v513 = vunpack.c.l.b16 %v222
        %v514 = vunpack.c.l.b16 %v223
        %v515 = vunpack.c.l.b16 %v224
        %v516 = vunpack.c.l.b16 %v225
        %v517 = vunpack.c.l.b16 %v226
        %v518 = vunpack.c.l.b16 %v227
        %v519 = vunpack.c.l.b16 %v228
        %v520 = vunpack.c.l.b16 %v229
        %v521 = vunpack.c.l.b16 %v230
        %v522 = vunpack.c.l.b16 %v231
        %v523 = vunpack.c.l.b16 %v232
        %v524 = vunpack.c.l.b16 %v233
        %v525 = vunpack.c.l.b16 %v234
        %v526 = vunpack.c.l.b16 %v235
        %v527 = vunpack.c.l.b16 %v236
        %v528 = vunpack.c.l.b16 %v237
        %v529 = vunpack.c.l.b16 %v238
        %v530 = vunpack.c.l.b16 %v239
        %v531 = vunpack.c.l.b16 %v240
        %v532 = vunpack.c.l.b16 %v241
        %v533 = vunpack.c.l.b16 %v242
        %v534 = vunpack.c.l.b16 %v243
        %v535 = vunpack.c.l.b16 %v244
        %v536 = vunpack.c.l.b16 %v245
        %v537 = vunpack.c.l.b16 %v246
        %v538 = vunpack.c.l.b16 %v247
        %v539 = vunpack.c.l.b16 %v248
        %v540 = vunpack.c.l.b16 %v249
        %v541 = vunpack.c.l.b16 %v250
        %v542 = vunpack.c.l.b16 %v251
        %v543 = vunpack.c.l.b16 %v252
        %v544 = vunpack.c.l.b16 %v253
        %v545 = vunpack.c.l.b16 %v254
        %v546 = vunpack.c.l.b16 %v255
        %v547 = vunpack.c.l.b16 %v256
        %v548 = vunpack.c.l.b16 %v257
        %v549 = vunpack.c.l.b16 %v258
        %v550 = vunpack.c.l.b16 %v259
        %v551 = vunpack.c.l.b16 %v260
        %v552 = vunpack.c.l.b16 %v261
        %v553 = vunpack.c.l.b16 %v262
        %v554 = vunpack.c.l.b16 %v263
        %v555 = vunpack.c.l.b16 %v264
        %v556 = vunpack.c.l.b16 %v265
        %v557 = vunpack.c.l.b16 %v266
        %v558 = vunpack.c.l.b16 %v267
        %v559 = vunpack.c.l.b16 %v268
        %v560 = vunpack.c.l.b16 %v269
        %v561 = vunpack.c.l.b16 %v270
        %v562 = vunpack.c.l.b16 %v271
        %v563 = vunpack.c.l.b16 %v272
        %v564 = vunpack.c.l.b16 %v273
        %v565 = vunpack.c.l.b16 %v274
        %v566 = vunpack.c.l.b16 %v275
        %v567 = vunpack.c.l.b16 %v276
        %v568 = vunpack.c.l.b16 %v277
        %v569 = vunpack.c.l.b16 %v278
        %v570 = vunpack.c.l.b16 %v279
        %v571 = vunpack.c.l.b16 %v280
        %v572 = vunpack.c.l.b16 %v281
        %v573 = vunpack.c.l.b16 %v282
        %v574 = vunpack.c.l.b16 %v283
        %v575 = vunpack.c.l.b16 %v284
        %v576 = vunpack.c.l.b16 %v285
        %v577 = vunpack.c.l.b16 %v286
        %v578 = vunpack.c.l.b16 %v287
        %v579 = vunpack.c.l.b16 %v288
        %v580 = vunpack.c.l.b16 %v289
        %v581 = vunpack.c.l.b16 %v290
        %v582 = vunpack.c.l.b16 %v291
        %v583 = vunpack.c.l.b16 %v292
        %v584 = vunpack.c.l.b16 %v293
        %v585 = vunpack.c.l.b16 %v294
        %v586 = vunpack.c.l.b16 %v295
        %v587 = vunpack.c.l.b16 %v296
        %v588 = vunpack.c.l.b16 %v297
        %v589 = vunpack.c.l.b16 %v298
        %v590 = vunpack.c.l.b16 %v299
        %v591 = vunpack.c.l.b16 %v300
        %v592 = vunpack.c.l.b16 %v301
        %v593 = vpack.c.b16 %v466, %v465
        %v594 = vpack.c.b16 %v468, %v467
        %v595 = vpack.c.b16 %v470, %v469
        %v596 = vpack.c.b16 %v472, %v471
        %v597 = vpack.c.b16 %v474, %v473
        %v598 = vpack.c.b16 %v476, %v475
        %v599 = vpack.c.b16 %v478, %v477
        %v600 = vpack.c.b16 %v480, %v479
        %v601 = vpack.c.b16 %v482, %v481
        %v602 = vpack.c.b16 %v484, %v483
        %v603 = vpack.c.b16 %v486, %v485
        %v604 = vpack.c.b16 %v488, %v487
        %v605 = vpack.c.b16 %v490, %v489
        %v606 = vpack.c.b16 %v492, %v491
        %v607 = vpack.c.b16 %v494, %v493
        %v608 = vpack.c.b16 %v496, %v495
        %v609 = vpack.c.b16 %v498, %v497
        %v610 = vpack.c.b16 %v500, %v499
        %v611 = vpack.c.b16 %v502, %v501
        %v612 = vpack.c.b16 %v504, %v503
        %v613 = vpack.c.b16 %v506, %v505
        %v614 = vpack.c.b16 %v508, %v507
        %v615 = vpack.c.b16 %v510, %v509
        %v616 = vpack.c.b16 %v512, %v511
        %v617 = vpack.c.b16 %v514, %v513
        %v618 = vpack.c.b16 %v516, %v515
        %v619 = vpack.c.b16 %v518, %v517
        %v620 = vpack.c.b16 %v520, %v519
        %v621 = vpack.c.b16 %v522, %v521
        %v622 = vpack.c.b16 %v524, %v523
        %v623 = vpack.c.b16 %v526, %v525
        %v624 = vpack.c.b16 %v528, %v527
        %v625 = vpack.c.b16 %v530, %v529
        %v626 = vpack.c.b16 %v532, %v531
        %v627 = vpack.c.b16 %v534, %v533
        %v628 = vpack.c.b16 %v536, %v535
        %v629 = vpack.c.b16 %v538, %v537
        %v630 = vpack.c.b16 %v540, %v539
        %v631 = vpack.c.b16 %v542, %v541
        %v632 = vpack.c.b16 %v544, %v543
        %v633 = vpack.c.b16 %v546, %v545
        %v634 = vpack.c.b16 %v548, %v547
        %v635 = vpack.c.b16 %v550, %v549
        %v636 = vpack.c.b16 %v552, %v551
        %v637 = vpack.c.b16 %v554, %v553
        %v638 = vpack.c.b16 %v556, %v555
        %v639 = vpack.c.b16 %v558, %v557
        %v640 = vpack.c.b16 %v560, %v559
        %v641 = vpack.c.b16 %v562, %v561
        %v642 = vpack.c.b16 %v564, %v563
        %v643 = vpack.c.b16 %v566, %v565
        %v644 = vpack.c.b16 %v568, %v567
        %v645 = vpack.c.b16 %v570, %v569
        %v646 = vpack.c.b16 %v572, %v571
        %v647 = vpack.c.b16 %v574, %v573
        %v648 = vpack.c.b16 %v576, %v575
        %v649 = vpack.c.b16 %v578, %v577
        %v650 = vpack.c.b16 %v580, %v579
        %v651 = vpack.c.b16 %v582, %v581
        %v652 = vpack.c.b16 %v584, %v583
        %v653 = vpack.c.b16 %v586, %v585
        %v654 = vpack.c.b16 %v588, %v587
        %v655 = vpack.c.b16 %v590, %v589
        %v656 = vpack.c.b16 %v592, %v591
        %721 = vmatprep.subr.bf16.mxu0 0
        %722 = vmatpush1.bf16.msra.mxu0 %v593
        %723 = vmatprep.subr.bf16.mxu0 0
        %724 = vmatpush1.bf16.msra.mxu0 %v594
        %725 = vmatprep.subr.bf16.mxu0 0
        %726 = vmatpush1.bf16.msra.mxu0 %v595
        %727 = vmatprep.subr.bf16.mxu0 0
        %728 = vmatpush1.bf16.msra.mxu0 %v596
        %729 = vmatprep.subr.bf16.mxu0 0
        %730 = vmatpush1.bf16.msra.mxu0 %v597
        %731 = vmatprep.subr.bf16.mxu0 0
        %732 = vmatpush1.bf16.msra.mxu0 %v598
        %733 = vmatprep.subr.bf16.mxu0 0
        %734 = vmatpush1.bf16.msra.mxu0 %v599
        %735 = vmatprep.subr.bf16.mxu0 0
        %736 = vmatpush1.bf16.msra.mxu0 %v600
        %737 = vmatprep.subr.bf16.mxu0 0
        %738 = vmatpush1.bf16.msra.mxu0 %v601
        %739 = vmatprep.subr.bf16.mxu0 0
        %740 = vmatpush1.bf16.msra.mxu0 %v602
        %741 = vmatprep.subr.bf16.mxu0 0
        %742 = vmatpush1.bf16.msra.mxu0 %v603
        %743 = vmatprep.subr.bf16.mxu0 0
        %744 = vmatpush1.bf16.msra.mxu0 %v604
        %745 = vmatprep.subr.bf16.mxu0 0
        %746 = vmatpush1.bf16.msra.mxu0 %v605
        %747 = vmatprep.subr.bf16.mxu0 0
        %748 = vmatpush1.bf16.msra.mxu0 %v606
        %749 = vmatprep.subr.bf16.mxu0 0
        %750 = vmatpush1.bf16.msra.mxu0 %v607
        %751 = vmatprep.subr.bf16.mxu0 0
        %752 = vmatpush1.bf16.msra.mxu0 %v608
        %753 = vmatprep.mubr.bf16.mxu0 %v322
        %754 = vmatmul.mubr.bf16.gmra.mrb[0].mxu0 %v321
        %v755 = vpop.f32.mrb[0].mxu0
        %v756 = vadd.f32 %v307, %v755
        %v757 = vpop.f32.mrb[0].mxu0
        %v758 = vpop.f32.mrb[0].mxu0
        %v759 = vpop.f32.mrb[0].mxu0
        %760 = vdwg.mxu0
        %761 = vmatprep.subr.bf16.mxu0 0
        %762 = vmatpush1.bf16.msra.mxu0 %v609
        %763 = vmatprep.subr.bf16.mxu0 0
        %764 = vmatpush1.bf16.msra.mxu0 %v610
        %765 = vmatprep.subr.bf16.mxu0 0
        %766 = vmatpush1.bf16.msra.mxu0 %v611
        %767 = vmatprep.subr.bf16.mxu0 0
        %768 = vmatpush1.bf16.msra.mxu0 %v612
        %769 = vmatprep.subr.bf16.mxu0 0
        %770 = vmatpush1.bf16.msra.mxu0 %v613
        %771 = vmatprep.subr.bf16.mxu0 0
        %772 = vmatpush1.bf16.msra.mxu0 %v614
        %773 = vmatprep.subr.bf16.mxu0 0
        %774 = vmatpush1.bf16.msra.mxu0 %v615
        %775 = vmatprep.subr.bf16.mxu0 0
        %776 = vmatpush1.bf16.msra.mxu0 %v616
        %777 = vmatprep.subr.bf16.mxu0 0
        %778 = vmatpush1.bf16.msra.mxu0 %v617
        %779 = vmatprep.subr.bf16.mxu0 0
        %780 = vmatpush1.bf16.msra.mxu0 %v618
        %781 = vmatprep.subr.bf16.mxu0 0
        %782 = vmatpush1.bf16.msra.mxu0 %v619
        %783 = vmatprep.subr.bf16.mxu0 0
        %784 = vmatpush1.bf16.msra.mxu0 %v620
        %785 = vmatprep.subr.bf16.mxu0 0
        %786 = vmatpush1.bf16.msra.mxu0 %v621
        %787 = vmatprep.subr.bf16.mxu0 0
        %788 = vmatpush1.bf16.msra.mxu0 %v622
        %789 = vmatprep.subr.bf16.mxu0 0
        %790 = vmatpush1.bf16.msra.mxu0 %v623
        %791 = vmatprep.subr.bf16.mxu0 0
        %792 = vmatpush1.bf16.msra.mxu0 %v624
        %793 = vmatprep.mubr.bf16.mxu0 %v324
        %794 = vmatmul.mubr.bf16.gmra.mrb[0].mxu0 %v323
        %v795 = vpop.f32.mrb[0].mxu0
        %v796 = vadd.f32 %v756, %v795
        %v797 = vpop.f32.mrb[0].mxu0
        %v798 = vpop.f32.mrb[0].mxu0
        %v799 = vpop.f32.mrb[0].mxu0
        %800 = vdwg.mxu0
        %801 = vmatprep.subr.bf16.mxu0 0
        %802 = vmatpush1.bf16.msra.mxu0 %v625
        %803 = vmatprep.subr.bf16.mxu0 0
        %804 = vmatpush1.bf16.msra.mxu0 %v626
        %805 = vmatprep.subr.bf16.mxu0 0
        %806 = vmatpush1.bf16.msra.mxu0 %v627
        %807 = vmatprep.subr.bf16.mxu0 0
        %808 = vmatpush1.bf16.msra.mxu0 %v628
        %809 = vmatprep.subr.bf16.mxu0 0
        %810 = vmatpush1.bf16.msra.mxu0 %v629
        %811 = vmatprep.subr.bf16.mxu0 0
        %812 = vmatpush1.bf16.msra.mxu0 %v630
        %813 = vmatprep.subr.bf16.mxu0 0
        %814 = vmatpush1.bf16.msra.mxu0 %v631
        %815 = vmatprep.subr.bf16.mxu0 0
        %816 = vmatpush1.bf16.msra.mxu0 %v632
        %817 = vmatprep.subr.bf16.mxu0 0
        %818 = vmatpush1.bf16.msra.mxu0 %v633
        %819 = vmatprep.subr.bf16.mxu0 0
        %820 = vmatpush1.bf16.msra.mxu0 %v634
        %821 = vmatprep.subr.bf16.mxu0 0
        %822 = vmatpush1.bf16.msra.mxu0 %v635
        %823 = vmatprep.subr.bf16.mxu0 0
        %824 = vmatpush1.bf16.msra.mxu0 %v636
        %825 = vmatprep.subr.bf16.mxu0 0
        %826 = vmatpush1.bf16.msra.mxu0 %v637
        %827 = vmatprep.subr.bf16.mxu0 0
        %828 = vmatpush1.bf16.msra.mxu0 %v638
        %829 = vmatprep.subr.bf16.mxu0 0
        %830 = vmatpush1.bf16.msra.mxu0 %v639
        %831 = vmatprep.subr.bf16.mxu0 0
        %832 = vmatpush1.bf16.msra.mxu0 %v640
        %833 = vmatprep.mubr.bf16.mxu0 %v326
        %834 = vmatmul.mubr.bf16.gmra.mrb[0].mxu0 %v325
        %v835 = vpop.f32.mrb[0].mxu0
        %v836 = vadd.f32 %v796, %v835
        %v837 = vpop.f32.mrb[0].mxu0
        %v838 = vpop.f32.mrb[0].mxu0
        %v839 = vpop.f32.mrb[0].mxu0
        %840 = vdwg.mxu0
        %841 = vmatprep.subr.bf16.mxu0 0
        %842 = vmatpush1.bf16.msra.mxu0 %v641
        %843 = vmatprep.subr.bf16.mxu0 0
        %844 = vmatpush1.bf16.msra.mxu0 %v642
        %845 = vmatprep.subr.bf16.mxu0 0
        %846 = vmatpush1.bf16.msra.mxu0 %v643
        %847 = vmatprep.subr.bf16.mxu0 0
        %848 = vmatpush1.bf16.msra.mxu0 %v644
        %849 = vmatprep.subr.bf16.mxu0 0
        %850 = vmatpush1.bf16.msra.mxu0 %v645
        %851 = vmatprep.subr.bf16.mxu0 0
        %852 = vmatpush1.bf16.msra.mxu0 %v646
        %853 = vmatprep.subr.bf16.mxu0 0
        %854 = vmatpush1.bf16.msra.mxu0 %v647
        %855 = vmatprep.subr.bf16.mxu0 0
        %856 = vmatpush1.bf16.msra.mxu0 %v648
        %857 = vmatprep.subr.bf16.mxu0 0
        %858 = vmatpush1.bf16.msra.mxu0 %v649
        %859 = vmatprep.subr.bf16.mxu0 0
        %860 = vmatpush1.bf16.msra.mxu0 %v650
        %861 = vmatprep.subr.bf16.mxu0 0
        %862 = vmatpush1.bf16.msra.mxu0 %v651
        %863 = vmatprep.subr.bf16.mxu0 0
        %864 = vmatpush1.bf16.msra.mxu0 %v652
        %865 = vmatprep.subr.bf16.mxu0 0
        %866 = vmatpush1.bf16.msra.mxu0 %v653
        %867 = vmatprep.subr.bf16.mxu0 0
        %868 = vmatpush1.bf16.msra.mxu0 %v654
        %869 = vmatprep.subr.bf16.mxu0 0
        %870 = vmatpush1.bf16.msra.mxu0 %v655
        %871 = vmatprep.subr.bf16.mxu0 0
        %872 = vmatpush1.bf16.msra.mxu0 %v656
        %873 = vmatprep.mubr.bf16.mxu0 %v328
        %874 = vmatmul.mubr.bf16.gmra.mrb[0].mxu0 %v327
        %v875 = vpop.f32.mrb[0].mxu0
        %v876 = vadd.f32 %v836, %v875
        %v877 = vpop.f32.mrb[0].mxu0
        %v878 = vpop.f32.mrb[0].mxu0
        %v879 = vpop.f32.mrb[0].mxu0
        %880 = vdwg.mxu0
        %v881 = vpack.c.bf16 %v876, %v876
        %vm882 = vcmask 257024
        %883 = vst.msk [vmem:[%s163] sm:$0xf] %vm882, %v881
        %s884 = sand.u32 %s93, 1
        %s885 = scalar_lea.sflag [#allocation3], %s884
        %s886 = sand.u32 %s93, 1
        %s887 = smul.addr %s886, 4
        %s888 = scalar_lea.vmem [#allocation2], %s887
        // Predicated region
        $region33: #{tpu_custom_call.1} parent=31 // pred_check
          %p889 = pneg %p103
        $region34: #{tpu_custom_call.1} parent=31 // pred_check_branch
          %891 = sbr.rel (%p889) target = $region36
        $region35: #{tpu_custom_call.1} parent=31 // pred_region
          %s893 = ssub.s32 64, 64
          %894 = vsyncadd %s885, %s893
          %s895 = smul.addr %s17, 64
          %s896 = scalar_lea.hbm %s3, %s895
          %s898 = sshll.u32 %s888, 4
          %s899 = int_to_ptr.vmem [resolvable:$true] %s898
          %901 = dma.vmem_to_hbm [thread:$0]  %s899, 64, %s896, %s885
        $region36: #{tpu_custom_call.1} parent=31 // pred_fallthru
          _
      $region32: #{tpu_custom_call.1} parent=5 // pred_fallthru
        _
      %p902 = scmp.le.s32.totalorder 2, %s12
      // Predicated region
      $region37: #{tpu_custom_call.1} parent=5 // pred_check
        %p903 = pneg %p902
      $region38: #{tpu_custom_call.1} parent=5 // pred_check_branch
        %905 = sbr.rel (%p903) target = $region40
      $region39: #{tpu_custom_call.1} parent=5 // pred_region
        %s906 = ssub.s32 %s12, 2
        // Predicated region
        $region41: #{tpu_custom_call.1} parent=39 // pred_check
          %p907 = pneg %p109
        $region42: #{tpu_custom_call.1} parent=39 // pred_check_branch
          %909 = sbr.rel (%p907) target = $region44
        $region43: #{tpu_custom_call.1} parent=39 // pred_region
          %s910 = sand.u32 %s94, 1
          %s911 = scalar_lea.sflag [#allocation3], %s910
          %s912 = sand.u32 %s94, 1
          %s913 = smul.addr %s912, 4
          %s914 = scalar_lea.vmem [#allocation2], %s913
          %915 = dma.done %s911, 64
        $region44: #{tpu_custom_call.1} parent=39 // pred_fallthru
          _
      $region40: #{tpu_custom_call.1} parent=5 // pred_fallthru
        _
    $region6: #{tpu_custom_call.1} parent=1 // loop_footer
      %s16 = sadd.s32 1, %s12
    $region7: #{tpu_custom_call.1} parent=1 // loop_footer_branch
      %11 = sbr.rel target = $region3
    $region8: #{tpu_custom_call.1} parent=1 // loop_exit
      _
    %916 = vsyncpa [#allocation3], 1
    %s917 = scalar_lea.sflag [#allocation3], 1
    %918 = vsyncpa %s917, 1

</llo_original>
